<compile_context>
chip_gen: v7x
topology: tpu7x:2x2x1
jax: 0.10.0
libtpu: 0.0.40
codegen_flags: <defaults>
</compile_context>

<pallas_src>
import jax
import jax.numpy as jnp
from jax.experimental import pallas as pl
from jax.experimental.pallas import tpu as pltpu


def _vmem_budgets():
    """Returns (tile_budget_bytes, vmem_limit_bytes), generation-aware."""
    cap = None
    try:
        cap = getattr(pltpu.get_tpu_info(), "vmem_capacity_bytes", None)
    except Exception:
        cap = None
    if not cap:
        cap = 64 * 1024 * 1024          # conservative: v7x per-TensorCore VMEM
    # Scoped limit: 3/4 of physical VMEM, never above 96 MiB.
    vmem_limit = min((int(cap) * 3) // 4, 96 * 1024 * 1024)
    # Tile budget (blocks + compute temps): leave headroom for Mosaic's own
    # internal scratch below the scoped limit.
    tile_budget = (vmem_limit * 4) // 5
    return tile_budget, vmem_limit


def _choose_row_tile(nc, hw, elt_size, budget_bytes):
    """Pick a row tile: multiple of 8, fits blocks + f32 temps, >= 4 grid steps."""
    if nc < 8:
        # A single block equal to the full (short) sublane extent is legal
        # (block dim == full array dim satisfies the (8,128) rule).
        return nc
    # Per-row VMEM footprint:
    #   * double-buffered DMA blocks: (2 inputs + 1 output) * 2 buffers * elt
    #   * ~4 full-tile f32 compute temporaries (x, y, dx, dy / out)
    per_row_bytes = hw * (6 * elt_size + 4 * 4)
    tr = (budget_bytes // per_row_bytes) // 8 * 8
    if tr < 8:
        # TODO(synk): add an HW-tiled two-pass (stats pass, then apply pass)
        # fallback for very large feature maps instead of failing here.
        raise ValueError(
            f"AdaIN row tile does not fit in VMEM (H*W={hw}, itemsize="
            f"{elt_size}); feature map too large for the single-pass kernel.")
    nc8 = ((nc + 7) // 8) * 8
    tr = min(tr, nc8)
    # Keep the 1-D "parallel" grid at >= 4 (or >= 2) steps when the row count
    # allows it, so both v7x TensorCores get pipelined work.  Extra steps cost
    # ~0.35 us each -> negligible on v5e/v6e.
    if nc8 >= 32:
        tr = min(tr, max(8, (nc8 // 4) // 8 * 8))
    elif nc8 >= 16:
        tr = min(tr, max(8, (nc8 // 2) // 8 * 8))
    return tr


def _adain_kernel(x_ref, y_ref, o_ref):
    eps = 1e-5
    x = x_ref[...].astype(jnp.float32)   # (TR, HW)
    y = y_ref[...].astype(jnp.float32)   # (TR, HW)

    hw = x.shape[-1]
    inv_n = 1.0 / hw
    # torch.std is unbiased (divide by HW - 1).  HW == 1 would be 0/0 = nan in
    # torch; guard only against a trace-time ZeroDivisionError here.
    inv_nm1 = 1.0 / (hw - 1) if hw > 1 else 0.0

    mean_x = jnp.sum(x, axis=-1, keepdims=True) * inv_n
    mean_y = jnp.sum(y, axis=-1, keepdims=True) * inv_n

    dx = x - mean_x
    dy = y - mean_y

    var_x = jnp.sum(dx * dx, axis=-1, keepdims=True) * inv_nm1
    var_y = jnp.sum(dy * dy, axis=-1, keepdims=True) * inv_nm1

    std_x = jnp.sqrt(var_x) + eps         # eps after sqrt, as in the module
    std_y = jnp.sqrt(var_y) + eps

    # Per-row (TR,1) ratio: one divide per row instead of a full-tile divide.
    ratio = std_y / std_x

    o_ref[...] = (dx * ratio + mean_y).astype(o_ref.dtype)


def adain(x, y):
    """AdaIN forward.  x, y: (N, C, H, W) arrays of identical shape/dtype."""
    assert x.shape == y.shape, "x and y must have the same shape"
    N, C, H, W = x.shape
    NC, HW = N * C, H * W
    elt = jnp.dtype(x.dtype).itemsize

    x2 = x.reshape(NC, HW)
    y2 = y.reshape(NC, HW)

    tile_budget, vmem_limit = _vmem_budgets()
    tr = _choose_row_tile(NC, HW, elt, tile_budget)
    grid = pl.cdiv(NC, tr)   # ragged last block is masked by Pallas (no pad/slice)

    # TODO(synk): for HW < 128 the lane axis is under-filled (masked stores);
    # typical feature maps (HW >= 256) are fine.

    cost = pl.CostEstimate(
        flops=10 * NC * HW,                 # subs/muls/adds per element
        transcendentals=2 * NC,             # two sqrt per row
        bytes_accessed=3 * NC * HW * elt,   # 2 reads + 1 write
    )

    out2 = pl.pallas_call(
        _adain_kernel,
        out_shape=jax.ShapeDtypeStruct((NC, HW), x.dtype),
        grid_spec=pltpu.PrefetchScalarGridSpec(
            num_scalar_prefetch=0,
            grid=(grid,),
            in_specs=[
                pl.BlockSpec((tr, HW), lambda i: (i, 0)),
                pl.BlockSpec((tr, HW), lambda i: (i, 0)),
            ],
            out_specs=pl.BlockSpec((tr, HW), lambda i: (i, 0)),
        ),
        compiler_params=pltpu.CompilerParams(
            dimension_semantics=("parallel",),
            vmem_limit_bytes=vmem_limit,
        ),
        cost_estimate=cost,
    )(x2, y2)

    return out2.reshape(N, C, H, W)


def _adain_ref(x, y):
    """Pure-JAX reference mirroring the PyTorch module (unbiased std)."""
    eps = 1e-5
    mean_x = jnp.mean(x, axis=(2, 3), keepdims=True)
    mean_y = jnp.mean(y, axis=(2, 3), keepdims=True)
    std_x = jnp.std(x, axis=(2, 3), keepdims=True, ddof=1) + eps
    std_y = jnp.std(y, axis=(2, 3), keepdims=True, ddof=1) + eps
    return (x - mean_x) / std_x * std_y + mean_y


if __name__ == "__main__":
    key = jax.random.PRNGKey(0)
    kx, ky, kx2, ky2 = jax.random.split(key, 4)

    # Primary small test (NC = 8 divides the 8-row tile evenly).
    N, C, H, W = 2, 4, 16, 16
    x = jax.random.normal(kx, (N, C, H, W), dtype=jnp.float32) * 2.0 + 0.5
    y = jax.random.normal(ky, (N, C, H, W), dtype=jnp.float32) * 0.7 - 1.0

    out = jax.block_until_ready(adain(x, y))
    ref = _adain_ref(x, y)
    assert out.shape == (N, C, H, W)
    assert jnp.allclose(out, ref, atol=1e-4, rtol=1e-4), (
        f"max abs err = {float(jnp.max(jnp.abs(out - ref)))}"
    )

    # Ragged test: NC = 15 is not a multiple of the row tile, exercising the
    # cdiv-grid boundary-block masking that replaced the old pad/slice path.
    N2, C2 = 3, 5
    x2 = jax.random.normal(kx2, (N2, C2, H, W), dtype=jnp.float32) * 1.3 + 0.2
    y2 = jax.random.normal(ky2, (N2, C2, H, W), dtype=jnp.float32) * 0.5 + 2.0

    out2 = jax.block_until_ready(adain(x2, y2))
    ref2 = _adain_ref(x2, y2)
    assert out2.shape == (N2, C2, H, W)
    assert jnp.allclose(out2, ref2, atol=1e-4, rtol=1e-4), (
        f"max abs err (ragged) = {float(jnp.max(jnp.abs(out2 - ref2)))}"
    )

    print("KERNEL_OK")
</pallas_src>

<mosaic_0001>
module attributes {stable_mosaic.version = 11 : i64} {
  func.func @_adain_kernel(%arg0: i32, %arg1: memref<8x256xf32, #tpu.memory_space<vmem>>, %arg2: memref<8x256xf32, #tpu.memory_space<vmem>>, %arg3: memref<8x256xf32, #tpu.memory_space<vmem>>) attributes {dimension_semantics = [#tpu.dimension_semantics<parallel>], iteration_bounds = array<i64: 1>, scalar_prefetch = 0 : i64, scratch_operands = 0 : i64, tpu.core_type = #tpu.core_type<tc>, window_params = [{transform_indices = @transform_0, window_bounds = array<i64: 8, 256>}, {transform_indices = @transform_1, window_bounds = array<i64: 8, 256>}, {transform_indices = @transform_2, window_bounds = array<i64: 8, 256>}]} {
    %c0 = arith.constant 0 : index
    %c0_0 = arith.constant 0 : index
    %0 = vector.load %arg1[%c0, %c0_0] : memref<8x256xf32, #tpu.memory_space<vmem>>, vector<8x256xf32>
    %c0_1 = arith.constant 0 : index
    %c0_2 = arith.constant 0 : index
    %1 = vector.load %arg2[%c0_1, %c0_2] : memref<8x256xf32, #tpu.memory_space<vmem>>, vector<8x256xf32>
    %cst = arith.constant dense<0.000000e+00> : vector<8xf32>
    %2 = vector.multi_reduction <add>, %0, %cst [1] : vector<8x256xf32> to vector<8xf32>
    %3 = vector.shape_cast %2 : vector<8xf32> to vector<8x1xf32>
    %cst_3 = arith.constant 3.906250e-03 : f32
    %4 = vector.broadcast %cst_3 : f32 to vector<8x1xf32>
    %5 = arith.mulf %3, %4 : vector<8x1xf32>
    %cst_4 = arith.constant dense<0.000000e+00> : vector<8xf32>
    %6 = vector.multi_reduction <add>, %1, %cst_4 [1] : vector<8x256xf32> to vector<8xf32>
    %7 = vector.shape_cast %6 : vector<8xf32> to vector<8x1xf32>
    %cst_5 = arith.constant 3.906250e-03 : f32
    %8 = vector.broadcast %cst_5 : f32 to vector<8x1xf32>
    %9 = arith.mulf %7, %8 : vector<8x1xf32>
    %10 = vector.broadcast %5 : vector<8x1xf32> to vector<8x256xf32>
    %11 = arith.subf %0, %10 : vector<8x256xf32>
    %12 = vector.broadcast %9 : vector<8x1xf32> to vector<8x256xf32>
    %13 = arith.subf %1, %12 : vector<8x256xf32>
    %14 = arith.mulf %11, %11 : vector<8x256xf32>
    %cst_6 = arith.constant dense<0.000000e+00> : vector<8xf32>
    %15 = vector.multi_reduction <add>, %14, %cst_6 [1] : vector<8x256xf32> to vector<8xf32>
    %16 = vector.shape_cast %15 : vector<8xf32> to vector<8x1xf32>
    %cst_7 = arith.constant 0.00392156886 : f32
    %17 = vector.broadcast %cst_7 : f32 to vector<8x1xf32>
    %18 = arith.mulf %16, %17 : vector<8x1xf32>
    %19 = arith.mulf %13, %13 : vector<8x256xf32>
    %cst_8 = arith.constant dense<0.000000e+00> : vector<8xf32>
    %20 = vector.multi_reduction <add>, %19, %cst_8 [1] : vector<8x256xf32> to vector<8xf32>
    %21 = vector.shape_cast %20 : vector<8xf32> to vector<8x1xf32>
    %cst_9 = arith.constant 0.00392156886 : f32
    %22 = vector.broadcast %cst_9 : f32 to vector<8x1xf32>
    %23 = arith.mulf %21, %22 : vector<8x1xf32>
    %24 = math.sqrt %18 : vector<8x1xf32>
    %cst_10 = arith.constant 9.99999974E-6 : f32
    %25 = vector.broadcast %cst_10 : f32 to vector<8x1xf32>
    %26 = arith.addf %24, %25 : vector<8x1xf32>
    %27 = math.sqrt %23 : vector<8x1xf32>
    %cst_11 = arith.constant 9.99999974E-6 : f32
    %28 = vector.broadcast %cst_11 : f32 to vector<8x1xf32>
    %29 = arith.addf %27, %28 : vector<8x1xf32>
    %30 = arith.divf %29, %26 : vector<8x1xf32>
    %31 = vector.broadcast %30 : vector<8x1xf32> to vector<8x256xf32>
    %32 = arith.mulf %11, %31 : vector<8x256xf32>
    %33 = vector.broadcast %9 : vector<8x1xf32> to vector<8x256xf32>
    %34 = arith.addf %32, %33 : vector<8x256xf32>
    %c0_12 = arith.constant 0 : index
    %c0_13 = arith.constant 0 : index
    %35 = vector.load %arg3[%c0_12, %c0_13] : memref<8x256xf32, #tpu.memory_space<vmem>>, vector<8x256xf32>
    tpu.vector_store %arg3[%c0_12, %c0_13], %34 {strides = array<i32>} : memref<8x256xf32, #tpu.memory_space<vmem>>, vector<8x256xf32>,
    return
  }
  func.func @transform_0(%arg0: i32) -> (i32, i32) {
    %c0_i32 = arith.constant 0 : i32
    %c0_i32_0 = arith.constant 0 : i32
    return %arg0, %c0_i32 : i32, i32
  }
  func.func @transform_1(%arg0: i32) -> (i32, i32) {
    %c0_i32 = arith.constant 0 : i32
    %c0_i32_0 = arith.constant 0 : i32
    return %arg0, %c0_i32 : i32, i32
  }
  func.func @transform_2(%arg0: i32) -> (i32, i32) {
    %c0_i32 = arith.constant 0 : i32
    %c0_i32_0 = arith.constant 0 : i32
    return %arg0, %c0_i32 : i32, i32
  }
}

</mosaic_0001>

<llo_original>
// kernel: tpu_custom_call.1
$region0: #{tpu_custom_call.1}
  #allocation0 [shape = 'u32[]', space=smem, size = 0x4, offset = 0x4, fixed_abs, tag = 'smem constant byte address 0x4 - core index']
  #allocation1 [shape = 'u32[144,128]{1,0:T(1,128)}', space=vmem, size = 0x12000, scoped, tag = 'internal scratch']
  %s0 = inlined_call_operand.hbm [shape: f32[8,256], index: 0, kind: input, shape index: {}]
  %s1 = inlined_call_operand.hbm [shape: f32[8,256], index: 1, kind: input, shape index: {}]
  %s2 = inlined_call_operand.hbm [shape: f32[8,256], index: 2, kind: output, shape index: {}]
  %s3 = sld [smem:[#allocation0]]
  $region26: #{tpu_custom_call.1} parent=0
    _
  %s5 = ssub.s32 1, %s3
  %s6 = scalar_select 0, %s5, %s3
  $region1: #{tpu_custom_call.1} parent=0
    #allocation2 [shape = 'u8[8192]{0}', space=vmem, size = 0x2000, scoped, tag = 'input window, operand 0, single buffered']
    #allocation3 [shape = 's32[1]{0}', space=sflag, size = 0x4, scoped, tag = 'scoped memory for tpu_custom_call.1']
    #allocation4 [shape = 's32[1]{0}', space=sflag, size = 0x4, scoped, tag = 'scoped memory for tpu_custom_call.1']
    #allocation5 [shape = 'u8[8192]{0}', space=vmem, size = 0x2000, scoped, tag = 'input window, operand 1, single buffered']
    #allocation6 [shape = 's32[1]{0}', space=sflag, size = 0x4, scoped, tag = 'scoped memory for tpu_custom_call.1']
    #allocation7 [shape = 'u8[8192]{0}', space=vmem, size = 0x2000, scoped, tag = 'output window, operand 0, single buffered']
    %7 = vsyncpa [#allocation3], 0
    %8 = vsyncpa [#allocation6], 0
    %9 = vsyncpa [#allocation4], 0
    // Predicated region
    $region2: #{tpu_custom_call.1} parent=1 // pred_check
      _
    $region3: #{tpu_custom_call.1} parent=1 // pred_check_branch
      %11 = sbr.rel (0) target = $region5
    $region4: #{tpu_custom_call.1} parent=1 // pred_region
      %s13 = ssub.s32 256, 256
      %14 = vsyncadd [#allocation3], %s13
      %s16 = sshll.u32 [#allocation2], 4
      %s17 = int_to_ptr.vmem [resolvable:$true] %s16
      %19 = dma.hbm_to_vmem [thread:$0]  %s0, 256, %s17, [#allocation3]
    $region5: #{tpu_custom_call.1} parent=1 // pred_fallthru
      _
    // Predicated region
    $region6: #{tpu_custom_call.1} parent=1 // pred_check
      _
    $region7: #{tpu_custom_call.1} parent=1 // pred_check_branch
      %21 = sbr.rel (0) target = $region9
    $region8: #{tpu_custom_call.1} parent=1 // pred_region
      %s23 = ssub.s32 256, 256
      %24 = vsyncadd [#allocation6], %s23
      %s26 = sshll.u32 [#allocation5], 4
      %s27 = int_to_ptr.vmem [resolvable:$true] %s26
      %29 = dma.hbm_to_vmem [thread:$0]  %s1, 256, %s27, [#allocation6]
    $region9: #{tpu_custom_call.1} parent=1 // pred_fallthru
      _
    // Predicated region
    $region10: #{tpu_custom_call.1} parent=1 // pred_check
      _
    $region11: #{tpu_custom_call.1} parent=1 // pred_check_branch
      %31 = sbr.rel (0) target = $region13
    $region12: #{tpu_custom_call.1} parent=1 // pred_region
      %32 = dma.done [#allocation3], 256
    $region13: #{tpu_custom_call.1} parent=1 // pred_fallthru
      _
    // Predicated region
    $region14: #{tpu_custom_call.1} parent=1 // pred_check
      _
    $region15: #{tpu_custom_call.1} parent=1 // pred_check_branch
      %34 = sbr.rel (0) target = $region17
    $region16: #{tpu_custom_call.1} parent=1 // pred_region
      %35 = dma.done [#allocation6], 256
    $region17: #{tpu_custom_call.1} parent=1 // pred_fallthru
      _
    %v36 = vld [vmem:[#allocation2] sm:$0xff]
    %v37 = vld [vmem:[#allocation2 + $0x8] sm:$0xff]
    %v38 = vld [vmem:[#allocation5] sm:$0xff]
    %v39 = vld [vmem:[#allocation5 + $0x8] sm:$0xff]
    %v40 = vadd.f32 %v36, %v37
    %41 = vadd.xlane.f32.xlu0 %v40
    %v42 = vpop.xlane.xlu0 %41
    %v43 = vmul.f32 %v42, 0.00390625
    %v44 = vadd.f32 %v38, %v39
    %45 = vadd.xlane.f32.xlu0 %v44
    %v46 = vpop.xlane.xlu0 %45
    %v47 = vmul.f32 %v46, 0.00390625
    %v48 = vsub.f32 %v36, %v43
    %v49 = vsub.f32 %v37, %v43
    %v50 = vsub.f32 %v38, %v47
    %v51 = vsub.f32 %v39, %v47
    %v52 = vmul.f32 %v48, %v48
    %v53 = vmul.f32 %v49, %v49
    %v54 = vadd.f32 %v52, %v53
    %55 = vadd.xlane.f32.xlu0 %v54
    %v56 = vpop.xlane.xlu0 %55
    %v57 = vmul.f32 %v56, 0.003921569
    %v58 = vmul.f32 %v50, %v50
    %v59 = vmul.f32 %v51, %v51
    %v60 = vadd.f32 %v58, %v59
    %61 = vadd.xlane.f32.xlu0 %v60
    %v62 = vpop.xlane.xlu0 %61
    %v63 = vmul.f32 %v62, 0.003921569
    %v64 = vrsqrt.pop %v57
    %v65 = vmul.f32 %v57, %v64
    %vm66 = vcmp.eq.f32.partialorder %v57, inf
    %v67 = vsel %vm66, %v57, %v65
    %vm68 = vcmp.eq.f32.partialorder %v57, 0.0
    %v69 = vand.u32 %v57, 2147483648
    %v70 = vsel %vm68, %v69, %v67
    %v71 = vadd.f32 %v70, 1e-05
    %v72 = vrsqrt.pop %v63
    %v73 = vmul.f32 %v63, %v72
    %vm74 = vcmp.eq.f32.partialorder %v63, inf
    %v75 = vsel %vm74, %v63, %v73
    %vm76 = vcmp.eq.f32.partialorder %v63, 0.0
    %v77 = vand.u32 %v63, 2147483648
    %v78 = vsel %vm76, %v77, %v75
    %v79 = vadd.f32 %v78, 1e-05
    %v80 = vrcp.pop %v71
    %v81 = vmul.f32 %v79, %v80
    %v82 = vmul.f32 %v48, %v81
    %v83 = vmul.f32 %v49, %v81
    %v84 = vadd.f32 %v82, %v47
    %v85 = vadd.f32 %v83, %v47
    %86 = vst [vmem:[#allocation7] sm:$0xff] %v84
    %87 = vst [vmem:[#allocation7 + $0x8] sm:$0xff] %v85
    // Predicated region
    $region18: #{tpu_custom_call.1} parent=1 // pred_check
      _
    $region19: #{tpu_custom_call.1} parent=1 // pred_check_branch
      %89 = sbr.rel (0) target = $region21
    $region20: #{tpu_custom_call.1} parent=1 // pred_region
      %s91 = ssub.s32 256, 256
      %92 = vsyncadd [#allocation4], %s91
      %s94 = sshll.u32 [#allocation7], 4
      %s95 = int_to_ptr.vmem [resolvable:$true] %s94
      %97 = dma.vmem_to_hbm [thread:$0]  %s95, 256, %s2, [#allocation4]
    $region21: #{tpu_custom_call.1} parent=1 // pred_fallthru
      _
    // Predicated region
    $region22: #{tpu_custom_call.1} parent=1 // pred_check
      _
    $region23: #{tpu_custom_call.1} parent=1 // pred_check_branch
      %99 = sbr.rel (0) target = $region25
    $region24: #{tpu_custom_call.1} parent=1 // pred_region
      %100 = dma.done [#allocation4], 256
    $region25: #{tpu_custom_call.1} parent=1 // pred_fallthru
      _
    %101 = vsyncpa [#allocation3], 1
    %102 = vsyncpa [#allocation6], 1
    %103 = vsyncpa [#allocation4], 1

</llo_original>
